<compile_context>
chip_gen: v5e
topology: v5e:2x2
jax: 0.10.0
libtpu: 0.0.40
codegen_flags: <defaults>
</compile_context>

<pallas_src>
import functools

import jax
import jax.numpy as jnp
from jax.experimental import pallas as pl


GATES = ("i", "f", "og", "c")


# ----------------------------------------------------------------------------
# Pallas kernel: whole TLSTM cell step, one fused MXU matmul + elementwise.
# ----------------------------------------------------------------------------
def tlstm_kernel(hp, lhs_ref, cprev_ref, t_ref, w_ref, b_ref, out_ref):
    # lhs_ref:   [B, Din+2H]    = [x | hidden | prev_cell]
    # cprev_ref: [B, Hp]        prev_cell zero-padded to Hp lanes
    # t_ref:     [B, 1]         elapsed time
    # w_ref:     [Din+2H, 5Hp]  fused block weight (gate order i|f|og|c, then decomp)
    # b_ref:     [1, 5Hp]       fused bias
    # out_ref:   [B, 2Hp]       lane-dense (h_new | c_new)

    g = jnp.dot(lhs_ref[...], w_ref[...],
                preferred_element_type=jnp.float32) + b_ref[...]      # [B, 5Hp]

    # All slice boundaries are multiples of Hp=128 -> vreg-aligned, no relayout.
    pre_i = g[:, 0 * hp:1 * hp]
    pre_f = g[:, 1 * hp:2 * hp]
    pre_o = g[:, 2 * hp:3 * hp]
    pre_c = g[:, 3 * hp:4 * hp]
    pre_d = g[:, 4 * hp:5 * hp]

    # map_elapse_time: T = 1 / log(dt + e); applied as diag(T) @ C_ST, i.e. a
    # per-row scaling.  Reciprocal lands on the (otherwise idle) EUP slot.
    T = pl.reciprocal(jnp.log(t_ref[...] + 2.7183), approx=True)      # [B, 1]

    # Short-term memory decomposition.
    C_ST = jnp.tanh(pre_d)                                            # [B, Hp]
    c_prev = cprev_ref[...]
    c_adj = c_prev - C_ST + T * C_ST

    # Gates.
    i_g = jax.nn.sigmoid(pre_i)
    f_g = jax.nn.sigmoid(pre_f)
    o_g = jax.nn.sigmoid(pre_o)
    s_g = jnp.tanh(pre_c)

    c_new = f_g * c_adj + i_g * s_g
    h_new = o_g * jnp.tanh(c_new)

    out_ref[:, 0 * hp:1 * hp] = h_new
    out_ref[:, 1 * hp:2 * hp] = c_new


# ----------------------------------------------------------------------------
# Wrapper
# ----------------------------------------------------------------------------
def tlstm_forward(fused, x, hidden, prev_cell, time, hidden_dim, hidden_pad):
    B = x.shape[0]
    H, Hp = hidden_dim, hidden_pad

    lhs = jnp.concatenate([x, hidden, prev_cell], axis=1)             # [B, Din+2H]
    c_pad = jnp.pad(prev_cell, ((0, 0), (0, Hp - H)))                 # [B, Hp]

    out = pl.pallas_call(
        functools.partial(tlstm_kernel, Hp),
        out_shape=jax.ShapeDtypeStruct((B, 2 * Hp), jnp.float32),
    )(lhs, c_pad, time, fused["W"], fused["b"])

    h_new = out[:, 0:H]
    c_new = out[:, Hp:Hp + H]
    return h_new, c_new


# ----------------------------------------------------------------------------
# Parameter construction (PyTorch nn.Linear-style U(-k, k) init) and one-time
# algebraic fusion into the single block weight/bias used by the kernel.
# ----------------------------------------------------------------------------
def _linear(key, din, dout):
    kw, kb = jax.random.split(key)
    bound = 1.0 / jnp.sqrt(jnp.float32(din))
    W = jax.random.uniform(kw, (din, dout), jnp.float32, -bound, bound)  # [in, out]
    b = jax.random.uniform(kb, (1, dout), jnp.float32, -bound, bound)
    return W, b


def make_raw_params(key, input_dim, hidden_dim):
    keys = jax.random.split(key, 14)
    p = {}
    k = 0
    for g in GATES:
        p[f"W{g}_w"], p[f"W{g}_b"] = _linear(keys[k], input_dim, hidden_dim); k += 1   # Wi/Wf/Wog/Wc
        p[f"U{g}_w"], p[f"U{g}_b"] = _linear(keys[k], hidden_dim, hidden_dim); k += 1  # Ui/Uf/Uog/Uc
        p[f"B{g}_w"], p[f"B{g}_b"] = _linear(keys[k], hidden_dim, hidden_dim); k += 1  # bi/bf/bog/bc
    p["Wd_w"], p["Wd_b"] = _linear(keys[k], hidden_dim, hidden_dim); k += 1            # W_decomp
    p["Bd_w"], p["Bd_b"] = _linear(keys[k], hidden_dim, hidden_dim); k += 1            # b_decomp
    return p


def _pad_cols(a, width):
    return jnp.pad(a, ((0, 0), (0, width - a.shape[1])))


def fuse_params(p, input_dim, hidden_dim, hidden_pad):
    """Fold the 14 Linears into one [Din+2H, 5*Hp] block weight + [1, 5*Hp] bias."""
    H, Hp, Din = hidden_dim, hidden_pad, input_dim

    # Gate blocks (i | f | og | c), each zero-padded to Hp lanes.
    Wx = jnp.concatenate([_pad_cols(p[f"W{g}_w"], Hp) for g in GATES], axis=1)          # [Din, 4Hp]
    Wh = jnp.concatenate([_pad_cols(p[f"U{g}_w"] + p[f"B{g}_w"], Hp) for g in GATES],
                         axis=1)                                                        # [H, 4Hp]
    Wd = _pad_cols(p["Wd_w"] + p["Bd_w"], Hp)                                           # [H, Hp]

    K = Din + 2 * H
    W = jnp.zeros((K, 5 * Hp), jnp.float32)
    W = W.at[:Din, :4 * Hp].set(Wx)                    # x rows      -> gate columns
    W = W.at[Din:Din + H, :4 * Hp].set(Wh)             # hidden rows -> gate columns
    W = W.at[Din + H:, 4 * Hp:].set(Wd)                # cell rows   -> decomp columns

    b_gates = jnp.concatenate(
        [_pad_cols(p[f"W{g}_b"] + p[f"U{g}_b"] + p[f"B{g}_b"], Hp) for g in GATES],
        axis=1)                                                                         # [1, 4Hp]
    b_decomp = _pad_cols(p["Wd_b"] + p["Bd_b"], Hp)                                     # [1, Hp]
    b = jnp.concatenate([b_gates, b_decomp], axis=1)                                    # [1, 5Hp]

    return {"W": W, "b": b}


# ----------------------------------------------------------------------------
# Pure-JAX reference using the ORIGINAL (unfused) per-gate parameters.
# ----------------------------------------------------------------------------
def tlstm_ref(p, x, h, c_prev, t):
    T = 1.0 / jnp.log(t + 2.7183)
    C_ST = jnp.tanh(c_prev @ p["Wd_w"] + p["Wd_b"]
                    + c_prev @ p["Bd_w"] + p["Bd_b"])
    c_adj = c_prev - C_ST + T * C_ST

    def gate(g):
        return (x @ p[f"W{g}_w"] + p[f"W{g}_b"]
                + h @ p[f"U{g}_w"] + p[f"U{g}_b"]
                + h @ p[f"B{g}_w"] + p[f"B{g}_b"])

    i_g = jax.nn.sigmoid(gate("i"))
    f_g = jax.nn.sigmoid(gate("f"))
    o_g = jax.nn.sigmoid(gate("og"))
    s_g = jnp.tanh(gate("c"))
    c = f_g * c_adj + i_g * s_g
    return o_g * jnp.tanh(c), c


if __name__ == "__main__":
    B, input_dim, hidden_dim = 8, 16, 32
    hidden_pad = ((hidden_dim + 127) // 128) * 128     # 128: vreg-aligned gate width

    key = jax.random.PRNGKey(0)
    kp, kx, kh, kc, kt = jax.random.split(key, 5)

    raw = make_raw_params(kp, input_dim, hidden_dim)
    fused = fuse_params(raw, input_dim, hidden_dim, hidden_pad)   # one-time precompute

    x = jax.random.normal(kx, (B, input_dim), jnp.float32)
    hidden = jax.random.normal(kh, (B, hidden_dim), jnp.float32)
    prev_cell = jax.random.normal(kc, (B, hidden_dim), jnp.float32)
    time = jax.random.uniform(kt, (B, 1), jnp.float32, 0.1, 5.0)  # elapsed times > 0

    h_out, c_out = tlstm_forward(fused, x, hidden, prev_cell, time,
                                 hidden_dim, hidden_pad)
    jax.block_until_ready((h_out, c_out))

    h_ref, c_ref = tlstm_ref(raw, x, hidden, prev_cell, time)
    assert h_out.shape == (B, hidden_dim) and c_out.shape == (B, hidden_dim)
    assert jnp.allclose(h_out, h_ref, rtol=1e-2, atol=1e-2)
    assert jnp.allclose(c_out, c_ref, rtol=1e-2, atol=1e-2)

    print("KERNEL_OK")
</pallas_src>

<mosaic_0001>
module attributes {stable_mosaic.version = 11 : i64} {
  func.func @tlstm_kernel(%arg0: memref<8x80xf32, #tpu.memory_space<vmem>>, %arg1: memref<8x128xf32, #tpu.memory_space<vmem>>, %arg2: memref<8x1xf32, #tpu.memory_space<vmem>>, %arg3: memref<80x640xf32, #tpu.memory_space<vmem>>, %arg4: memref<1x640xf32, #tpu.memory_space<vmem>>, %arg5: memref<8x256xf32, #tpu.memory_space<vmem>>) attributes {dimension_semantics = [], scalar_prefetch = 0 : i64, scratch_operands = 0 : i64, tpu.core_type = #tpu.core_type<tc>} {
    %c0 = arith.constant 0 : index
    %c0_0 = arith.constant 0 : index
    %0 = vector.load %arg0[%c0, %c0_0] : memref<8x80xf32, #tpu.memory_space<vmem>>, vector<8x80xf32>
    %c0_1 = arith.constant 0 : index
    %c0_2 = arith.constant 0 : index
    %1 = vector.load %arg3[%c0_1, %c0_2] : memref<80x640xf32, #tpu.memory_space<vmem>>, vector<80x640xf32>
    %cst = arith.constant dense<0.000000e+00> : vector<8x640xf32>
    %2 = tpu.matmul %0, %1, %cst {dimension_numbers = #tpu.dot_dimension_numbers<[1], [0], [0], [1], [0, 0, 1, 1], [], []>} : vector<8x80xf32>, vector<80x640xf32>, vector<8x640xf32> -> vector<8x640xf32>
    %c0_3 = arith.constant 0 : index
    %c0_4 = arith.constant 0 : index
    %3 = vector.load %arg4[%c0_3, %c0_4] : memref<1x640xf32, #tpu.memory_space<vmem>>, vector<1x640xf32>
    %4 = vector.broadcast %3 : vector<1x640xf32> to vector<8x640xf32>
    %5 = arith.addf %2, %4 : vector<8x640xf32>
    %6 = vector.extract_strided_slice %5 {offsets = [0, 0], sizes = [8, 128], strides = [1, 1]} : vector<8x640xf32> to vector<8x128xf32>
    %7 = vector.extract_strided_slice %5 {offsets = [0, 128], sizes = [8, 128], strides = [1, 1]} : vector<8x640xf32> to vector<8x128xf32>
    %8 = vector.extract_strided_slice %5 {offsets = [0, 256], sizes = [8, 128], strides = [1, 1]} : vector<8x640xf32> to vector<8x128xf32>
    %9 = vector.extract_strided_slice %5 {offsets = [0, 384], sizes = [8, 128], strides = [1, 1]} : vector<8x640xf32> to vector<8x128xf32>
    %10 = vector.extract_strided_slice %5 {offsets = [0, 512], sizes = [8, 128], strides = [1, 1]} : vector<8x640xf32> to vector<8x128xf32>
    %c0_5 = arith.constant 0 : index
    %c0_6 = arith.constant 0 : index
    %11 = vector.load %arg2[%c0_5, %c0_6] : memref<8x1xf32, #tpu.memory_space<vmem>>, vector<8x1xf32>
    %cst_7 = arith.constant 2.718300e+00 : f32
    %12 = vector.broadcast %cst_7 : f32 to vector<8x1xf32>
    %13 = arith.addf %11, %12 : vector<8x1xf32>
    %14 = math.log %13 : vector<8x1xf32>
    %15 = tpu.reciprocal %14 {approx = true} : vector<8x1xf32> -> vector<8x1xf32>
    %16 = math.tanh %10 : vector<8x128xf32>
    %c0_8 = arith.constant 0 : index
    %c0_9 = arith.constant 0 : index
    %17 = vector.load %arg1[%c0_8, %c0_9] : memref<8x128xf32, #tpu.memory_space<vmem>>, vector<8x128xf32>
    %18 = arith.subf %17, %16 : vector<8x128xf32>
    %19 = vector.broadcast %15 : vector<8x1xf32> to vector<8x128xf32>
    %20 = arith.mulf %19, %16 : vector<8x128xf32>
    %21 = arith.addf %18, %20 : vector<8x128xf32>
    %22 = arith.negf %6 : vector<8x128xf32>
    %23 = math.exp %22 : vector<8x128xf32>
    %cst_10 = arith.constant 1.000000e+00 : f32
    %24 = vector.broadcast %cst_10 : f32 to vector<8x128xf32>
    %25 = arith.addf %24, %23 : vector<8x128xf32>
    %26 = arith.divf %24, %25 : vector<8x128xf32>
    %27 = arith.negf %7 : vector<8x128xf32>
    %28 = math.exp %27 : vector<8x128xf32>
    %cst_11 = arith.constant 1.000000e+00 : f32
    %29 = vector.broadcast %cst_11 : f32 to vector<8x128xf32>
    %30 = arith.addf %29, %28 : vector<8x128xf32>
    %31 = arith.divf %29, %30 : vector<8x128xf32>
    %32 = arith.negf %8 : vector<8x128xf32>
    %33 = math.exp %32 : vector<8x128xf32>
    %cst_12 = arith.constant 1.000000e+00 : f32
    %34 = vector.broadcast %cst_12 : f32 to vector<8x128xf32>
    %35 = arith.addf %34, %33 : vector<8x128xf32>
    %36 = arith.divf %34, %35 : vector<8x128xf32>
    %37 = math.tanh %9 : vector<8x128xf32>
    %38 = arith.mulf %31, %21 : vector<8x128xf32>
    %39 = arith.mulf %26, %37 : vector<8x128xf32>
    %40 = arith.addf %38, %39 : vector<8x128xf32>
    %41 = math.tanh %40 : vector<8x128xf32>
    %42 = arith.mulf %36, %41 : vector<8x128xf32>
    %c0_13 = arith.constant 0 : index
    %c0_14 = arith.constant 0 : index
    %43 = vector.load %arg5[%c0_13, %c0_14] : memref<8x256xf32, #tpu.memory_space<vmem>>, vector<8x128xf32>
    tpu.vector_store %arg5[%c0_13, %c0_14], %42 {strides = array<i32>} : memref<8x256xf32, #tpu.memory_space<vmem>>, vector<8x128xf32>,
    %c0_15 = arith.constant 0 : index
    %c128 = arith.constant 128 : index
    %44 = vector.load %arg5[%c0_15, %c128] : memref<8x256xf32, #tpu.memory_space<vmem>>, vector<8x128xf32>
    tpu.vector_store %arg5[%c0_15, %c128], %40 {strides = array<i32>} : memref<8x256xf32, #tpu.memory_space<vmem>>, vector<8x128xf32>,
    return
  }
}

</mosaic_0001>

<llo_original>
// kernel: tpu_custom_call.1
$region0: #{tpu_custom_call.1}
  #allocation0 [shape = 'u32[]', space=smem, size = 0x4, offset = 0x4, fixed_abs, tag = 'smem constant byte address 0x4 - core index']
  #allocation1 [shape = 'u32[72,128]{1,0:T(1,128)}', space=vmem, size = 0x9000, scoped, tag = 'internal scratch']
  %s0 = inlined_call_operand.vmem [shape: f32[8,80], index: 0, kind: input, shape index: {}]
  %s1 = inlined_call_operand.hbm [shape: f32[8,128], index: 1, kind: input, shape index: {}]
  %s2 = inlined_call_operand.vmem [shape: f32[8,1], index: 2, kind: input, shape index: {}]
  %s3 = inlined_call_operand.hbm [shape: f32[80,640], index: 3, kind: input, shape index: {}]
  %s4 = inlined_call_operand.hbm [shape: f32[1,640], index: 4, kind: input, shape index: {}]
  %s5 = inlined_call_operand.hbm [shape: f32[8,256], index: 5, kind: output, shape index: {}]
  %s6 = sld [smem:[#allocation0]]
  $region42: #{tpu_custom_call.1} parent=0
    _
  %s8 = ssub.s32 1, %s6
  %s9 = scalar_select 0, %s8, %s6
  $region1: #{tpu_custom_call.1} parent=0
    #allocation2 [shape = 'u8[4096]{0}', space=vmem, size = 0x1000, scoped, tag = 'input window, operand 1, single buffered']
    #allocation3 [shape = 's32[1]{0}', space=sflag, size = 0x4, scoped, tag = 'scoped memory for tpu_custom_call.1']
    #allocation4 [shape = 's32[1]{0}', space=sflag, size = 0x4, scoped, tag = 'scoped memory for tpu_custom_call.1']
    #allocation5 [shape = 'u8[204800]{0}', space=vmem, size = 0x32000, scoped, tag = 'input window, operand 3, single buffered']
    #allocation6 [shape = 's32[1]{0}', space=sflag, size = 0x4, scoped, tag = 'scoped memory for tpu_custom_call.1']
    #allocation7 [shape = 'u8[2560]{0}', space=vmem, size = 0xc00, scoped, tag = 'input window, operand 4, single buffered']
    #allocation8 [shape = 'u8[8192]{0}', space=vmem, size = 0x2000, scoped, tag = 'output window, operand 0, single buffered']
    %10 = vsyncpa [#allocation3], 0
    %11 = vsyncpa [#allocation6], 0
    %12 = vsyncpa [#allocation4], 0
    // Predicated region
    $region2: #{tpu_custom_call.1} parent=1 // pred_check
      _
    $region3: #{tpu_custom_call.1} parent=1 // pred_check_branch
      %14 = sbr.rel (0) target = $region5
    $region4: #{tpu_custom_call.1} parent=1 // pred_region
      _
    $region5: #{tpu_custom_call.1} parent=1 // pred_fallthru
      _
    // Predicated region
    $region6: #{tpu_custom_call.1} parent=1 // pred_check
      _
    $region7: #{tpu_custom_call.1} parent=1 // pred_check_branch
      %16 = sbr.rel (0) target = $region9
    $region8: #{tpu_custom_call.1} parent=1 // pred_region
      %18 = vsyncadd [#allocation3], 0
      %s20 = sshll.u32 %s1, 4
      %s21 = int_to_ptr.hbm [resolvable:$true] %s20
      %s22 = sshll.u32 [#allocation2], 4
      %s23 = int_to_ptr.vmem [resolvable:$true] %s22
      %25 = dma.hbm_to_vmem [thread:$0]  %s21, 128, %s23, [#allocation3]
    $region9: #{tpu_custom_call.1} parent=1 // pred_fallthru
      _
    // Predicated region
    $region10: #{tpu_custom_call.1} parent=1 // pred_check
      _
    $region11: #{tpu_custom_call.1} parent=1 // pred_check_branch
      %27 = sbr.rel (0) target = $region13
    $region12: #{tpu_custom_call.1} parent=1 // pred_region
      _
    $region13: #{tpu_custom_call.1} parent=1 // pred_fallthru
      _
    // Predicated region
    $region14: #{tpu_custom_call.1} parent=1 // pred_check
      _
    $region15: #{tpu_custom_call.1} parent=1 // pred_check_branch
      %29 = sbr.rel (0) target = $region17
    $region16: #{tpu_custom_call.1} parent=1 // pred_region
      %31 = vsyncadd [#allocation6], 0
      %s32 = sshll.u32 %s3, 4
      %s33 = int_to_ptr.hbm [resolvable:$true] %s32
      %s34 = sshll.u32 [#allocation5], 4
      %s35 = int_to_ptr.vmem [resolvable:$true] %s34
      %40 = dma.hbm_to_vmem [thread:$0]  %s33, 6400, %s35, [#allocation6], 640, 640, 40
    $region17: #{tpu_custom_call.1} parent=1 // pred_fallthru
      _
    // Predicated region
    $region18: #{tpu_custom_call.1} parent=1 // pred_check
      _
    $region19: #{tpu_custom_call.1} parent=1 // pred_check_branch
      %42 = sbr.rel (0) target = $region21
    $region20: #{tpu_custom_call.1} parent=1 // pred_region
      %44 = vsyncadd [#allocation6], 0
      %s46 = sshll.u32 %s4, 4
      %s47 = int_to_ptr.hbm [resolvable:$true] %s46
      %s48 = sshll.u32 [#allocation7], 4
      %s49 = int_to_ptr.vmem [resolvable:$true] %s48
      %51 = dma.hbm_to_vmem [thread:$0]  %s47, 80, %s49, [#allocation6]
    $region21: #{tpu_custom_call.1} parent=1 // pred_fallthru
      _
    // Predicated region
    $region22: #{tpu_custom_call.1} parent=1 // pred_check
      _
    $region23: #{tpu_custom_call.1} parent=1 // pred_check_branch
      %53 = sbr.rel (0) target = $region25
    $region24: #{tpu_custom_call.1} parent=1 // pred_region
      %55 = dma.done [#allocation3], 128
    $region25: #{tpu_custom_call.1} parent=1 // pred_fallthru
      _
    // Predicated region
    $region26: #{tpu_custom_call.1} parent=1 // pred_check
      _
    $region27: #{tpu_custom_call.1} parent=1 // pred_check_branch
      %57 = sbr.rel (0) target = $region29
    $region28: #{tpu_custom_call.1} parent=1 // pred_region
      %59 = dma.done [#allocation6], 6400
    $region29: #{tpu_custom_call.1} parent=1 // pred_fallthru
      _
    // Predicated region
    $region30: #{tpu_custom_call.1} parent=1 // pred_check
      _
    $region31: #{tpu_custom_call.1} parent=1 // pred_check_branch
      %61 = sbr.rel (0) target = $region33
    $region32: #{tpu_custom_call.1} parent=1 // pred_region
      %63 = dma.done [#allocation6], 80
    $region33: #{tpu_custom_call.1} parent=1 // pred_fallthru
      _
    %v64 = vld [vmem:[%s0] sm:$0xff]
    %v65 = vld [vmem:[#allocation5] sm:$0xff]
    %v66 = vld [vmem:[#allocation5 + $0x8] sm:$0xff]
    %v67 = vld [vmem:[#allocation5 + $0x10] sm:$0xff]
    %v68 = vld [vmem:[#allocation5 + $0x18] sm:$0xff]
    %v69 = vld [vmem:[#allocation5 + $0x20] sm:$0xff]
    %v70 = vld [vmem:[#allocation5 + $0x28] sm:$0xff]
    %v71 = vld [vmem:[#allocation5 + $0x30] sm:$0xff]
    %v72 = vld [vmem:[#allocation5 + $0x38] sm:$0xff]
    %v73 = vld [vmem:[#allocation5 + $0x40] sm:$0xff]
    %v74 = vld [vmem:[#allocation5 + $0x48] sm:$0xff]
    %v75 = vld [vmem:[#allocation5 + $0x50] sm:$0xff]
    %v76 = vld [vmem:[#allocation5 + $0x58] sm:$0xff]
    %v77 = vld [vmem:[#allocation5 + $0x60] sm:$0xff]
    %v78 = vld [vmem:[#allocation5 + $0x68] sm:$0xff]
    %v79 = vld [vmem:[#allocation5 + $0x70] sm:$0xff]
    %v80 = vld [vmem:[#allocation5 + $0x78] sm:$0xff]
    %v81 = vld [vmem:[#allocation5 + $0x80] sm:$0xff]
    %v82 = vld [vmem:[#allocation5 + $0x88] sm:$0xff]
    %v83 = vld [vmem:[#allocation5 + $0x90] sm:$0xff]
    %v84 = vld [vmem:[#allocation5 + $0x98] sm:$0xff]
    %v85 = vld [vmem:[#allocation5 + $0xa0] sm:$0xff]
    %v86 = vld [vmem:[#allocation5 + $0xa8] sm:$0xff]
    %v87 = vld [vmem:[#allocation5 + $0xb0] sm:$0xff]
    %v88 = vld [vmem:[#allocation5 + $0xb8] sm:$0xff]
    %v89 = vld [vmem:[#allocation5 + $0xc0] sm:$0xff]
    %v90 = vld [vmem:[#allocation5 + $0xc8] sm:$0xff]
    %v91 = vld [vmem:[#allocation5 + $0xd0] sm:$0xff]
    %v92 = vld [vmem:[#allocation5 + $0xd8] sm:$0xff]
    %v93 = vld [vmem:[#allocation5 + $0xe0] sm:$0xff]
    %v94 = vld [vmem:[#allocation5 + $0xe8] sm:$0xff]
    %v95 = vld [vmem:[#allocation5 + $0xf0] sm:$0xff]
    %v96 = vld [vmem:[#allocation5 + $0xf8] sm:$0xff]
    %v97 = vld [vmem:[#allocation5 + $0x100] sm:$0xff]
    %v98 = vld [vmem:[#allocation5 + $0x108] sm:$0xff]
    %v99 = vld [vmem:[#allocation5 + $0x110] sm:$0xff]
    %v100 = vld [vmem:[#allocation5 + $0x118] sm:$0xff]
    %v101 = vld [vmem:[#allocation5 + $0x120] sm:$0xff]
    %v102 = vld [vmem:[#allocation5 + $0x128] sm:$0xff]
    %v103 = vld [vmem:[#allocation5 + $0x130] sm:$0xff]
    %v104 = vld [vmem:[#allocation5 + $0x138] sm:$0xff]
    %v105 = vld [vmem:[#allocation5 + $0x140] sm:$0xff]
    %v106 = vld [vmem:[#allocation5 + $0x148] sm:$0xff]
    %v107 = vld [vmem:[#allocation5 + $0x150] sm:$0xff]
    %v108 = vld [vmem:[#allocation5 + $0x158] sm:$0xff]
    %v109 = vld [vmem:[#allocation5 + $0x160] sm:$0xff]
    %v110 = vld [vmem:[#allocation5 + $0x168] sm:$0xff]
    %v111 = vld [vmem:[#allocation5 + $0x170] sm:$0xff]
    %v112 = vld [vmem:[#allocation5 + $0x178] sm:$0xff]
    %v113 = vld [vmem:[#allocation5 + $0x180] sm:$0xff]
    %v114 = vld [vmem:[#allocation5 + $0x188] sm:$0xff]
    %v115 = vld [vmem:[#allocation7] sm:$0x1f]
    %v117 = vperm.slane %v115, 0
    %v118 = vperm.slane %v115, 1
    %v119 = vperm.slane %v115, 2
    %v120 = vperm.slane %v115, 3
    %v121 = vperm.slane %v115, 4
    %vm127 = vcmask 654336
    %v129 = vsel %vm127, %v64, 0
    %131 = vmatpush.msra.mxu0 0.0
    %132 = vmatpush.msra.mxu0 0.0
    %133 = vmatpush.msra.mxu0 0.0
    %134 = vmatpush.msra.mxu0 0.0
    %135 = vmatpush.msra.mxu0 0.0
    %136 = vmatpush.msra.mxu0 0.0
    %137 = vmatpush.msra.mxu0 %v110
    %138 = vmatpush.msra.mxu0 %v105
    %139 = vmatpush.msra.mxu0 %v100
    %140 = vmatpush.msra.mxu0 %v95
    %141 = vmatpush.msra.mxu0 %v90
    %142 = vmatpush.msra.mxu0 %v85
    %143 = vmatpush.msra.mxu0 %v80
    %144 = vmatpush.msra.mxu0 %v75
    %145 = vmatpush.msra.mxu0 %v70
    %146 = vmatpush.msra.mxu0 %v65
    %147 = vmatmul.f32.gmra.mxu0 %v129
    %v148 = vpop.f32.mrf.mxu0
    %v149 = vadd.f32 %v117, %v148
    %150 = vdwg.mxu0
    %151 = vmatpush.msra.mxu0 0.0
    %152 = vmatpush.msra.mxu0 0.0
    %153 = vmatpush.msra.mxu0 0.0
    %154 = vmatpush.msra.mxu0 0.0
    %155 = vmatpush.msra.mxu0 0.0
    %156 = vmatpush.msra.mxu0 0.0
    %157 = vmatpush.msra.mxu0 %v111
    %158 = vmatpush.msra.mxu0 %v106
    %159 = vmatpush.msra.mxu0 %v101
    %160 = vmatpush.msra.mxu0 %v96
    %161 = vmatpush.msra.mxu0 %v91
    %162 = vmatpush.msra.mxu0 %v86
    %163 = vmatpush.msra.mxu0 %v81
    %164 = vmatpush.msra.mxu0 %v76
    %165 = vmatpush.msra.mxu0 %v71
    %166 = vmatpush.msra.mxu0 %v66
    %167 = vmatmul.f32.gmra.mxu0 %v129
    %v168 = vpop.f32.mrf.mxu0
    %v169 = vadd.f32 %v118, %v168
    %170 = vdwg.mxu0
    %171 = vmatpush.msra.mxu0 0.0
    %172 = vmatpush.msra.mxu0 0.0
    %173 = vmatpush.msra.mxu0 0.0
    %174 = vmatpush.msra.mxu0 0.0
    %175 = vmatpush.msra.mxu0 0.0
    %176 = vmatpush.msra.mxu0 0.0
    %177 = vmatpush.msra.mxu0 %v112
    %178 = vmatpush.msra.mxu0 %v107
    %179 = vmatpush.msra.mxu0 %v102
    %180 = vmatpush.msra.mxu0 %v97
    %181 = vmatpush.msra.mxu0 %v92
    %182 = vmatpush.msra.mxu0 %v87
    %183 = vmatpush.msra.mxu0 %v82
    %184 = vmatpush.msra.mxu0 %v77
    %185 = vmatpush.msra.mxu0 %v72
    %186 = vmatpush.msra.mxu0 %v67
    %187 = vmatmul.f32.gmra.mxu0 %v129
    %v188 = vpop.f32.mrf.mxu0
    %v189 = vadd.f32 %v119, %v188
    %190 = vdwg.mxu0
    %191 = vmatpush.msra.mxu0 0.0
    %192 = vmatpush.msra.mxu0 0.0
    %193 = vmatpush.msra.mxu0 0.0
    %194 = vmatpush.msra.mxu0 0.0
    %195 = vmatpush.msra.mxu0 0.0
    %196 = vmatpush.msra.mxu0 0.0
    %197 = vmatpush.msra.mxu0 %v113
    %198 = vmatpush.msra.mxu0 %v108
    %199 = vmatpush.msra.mxu0 %v103
    %200 = vmatpush.msra.mxu0 %v98
    %201 = vmatpush.msra.mxu0 %v93
    %202 = vmatpush.msra.mxu0 %v88
    %203 = vmatpush.msra.mxu0 %v83
    %204 = vmatpush.msra.mxu0 %v78
    %205 = vmatpush.msra.mxu0 %v73
    %206 = vmatpush.msra.mxu0 %v68
    %207 = vmatmul.f32.gmra.mxu0 %v129
    %v208 = vpop.f32.mrf.mxu0
    %v209 = vadd.f32 %v120, %v208
    %210 = vdwg.mxu0
    %211 = vmatpush.msra.mxu0 0.0
    %212 = vmatpush.msra.mxu0 0.0
    %213 = vmatpush.msra.mxu0 0.0
    %214 = vmatpush.msra.mxu0 0.0
    %215 = vmatpush.msra.mxu0 0.0
    %216 = vmatpush.msra.mxu0 0.0
    %217 = vmatpush.msra.mxu0 %v114
    %218 = vmatpush.msra.mxu0 %v109
    %219 = vmatpush.msra.mxu0 %v104
    %220 = vmatpush.msra.mxu0 %v99
    %221 = vmatpush.msra.mxu0 %v94
    %222 = vmatpush.msra.mxu0 %v89
    %223 = vmatpush.msra.mxu0 %v84
    %224 = vmatpush.msra.mxu0 %v79
    %225 = vmatpush.msra.mxu0 %v74
    %226 = vmatpush.msra.mxu0 %v69
    %227 = vmatmul.f32.gmra.mxu0 %v129
    %v228 = vpop.f32.mrf.mxu0
    %v229 = vadd.f32 %v121, %v228
    %230 = vdwg.mxu0
    %v231 = vld [vmem:[%s2] sm:$0xff]
    %v232 = vadd.f32 %v231, 2.7183
    %v233 = vlog2.pop %v232
    %v234 = vmul.f32 %v233, 0.6931472
    %v235 = vrcp.pop %v234
    %v236 = vtanh.pop %v229
    %v237 = vld [vmem:[#allocation2] sm:$0xff]
    %v238 = vsub.f32 %v237, %v236
    %240 = vset.pattern.permute.xlu0 0
    %241 = vperm.xlu0 %240, %v235
    %v242 = vpop.permute.xlu0 %241
    %v244 = vmul.f32 %v242, %v236
    %v245 = vadd.f32 %v238, %v244
    %v246 = vxor.u32 %v149, 2147483648
    %v247 = vmul.f32 %v246, 1.442695
    %v248 = vpow.pop %v247
    %v249 = vadd.f32 %v248, 1.0
    %v250 = vrcp.pop %v249
    %v251 = vmul.f32 %v249, %v250
    %v252 = vsub.f32 1.0, %v251
    %v253 = vmul.f32 %v250, %v252
    %v254 = vadd.f32 %v250, %v253
    %vm255 = vweird.f32 %v249
    %vm256 = vweird.f32 %v250
    %vm257 = vmor %vm255, %vm256
    %v258 = vsel %vm257, %v250, %v254
    %v259 = vand.u32 2147483647, %v249
    %vm260 = vcmp.eq.f32.partialorder %v259, 8.507059e+37
    %v261 = vand.u32 %v249, 2147483648
    %v262 = vor.u32 1.1754944e-38, %v261
    %v263 = vsel %vm260, %v262, %v258
    %v264 = vmul.f32 1.0, %v263
    %v265 = vxor.u32 %v169, 2147483648
    %v266 = vmul.f32 %v265, 1.442695
    %v267 = vpow.pop %v266
    %v268 = vadd.f32 %v267, 1.0
    %v269 = vrcp.pop %v268
    %v270 = vmul.f32 %v268, %v269
    %v271 = vsub.f32 1.0, %v270
    %v272 = vmul.f32 %v269, %v271
    %v273 = vadd.f32 %v269, %v272
    %vm274 = vweird.f32 %v268
    %vm275 = vweird.f32 %v269
    %vm276 = vmor %vm274, %vm275
    %v277 = vsel %vm276, %v269, %v273
    %v278 = vand.u32 2147483647, %v268
    %vm279 = vcmp.eq.f32.partialorder %v278, 8.507059e+37
    %v280 = vand.u32 %v268, 2147483648
    %v281 = vor.u32 1.1754944e-38, %v280
    %v282 = vsel %vm279, %v281, %v277
    %v283 = vmul.f32 1.0, %v282
    %v284 = vxor.u32 %v189, 2147483648
    %v285 = vmul.f32 %v284, 1.442695
    %v286 = vpow.pop %v285
    %v287 = vadd.f32 %v286, 1.0
    %v288 = vrcp.pop %v287
    %v289 = vmul.f32 %v287, %v288
    %v290 = vsub.f32 1.0, %v289
    %v291 = vmul.f32 %v288, %v290
    %v292 = vadd.f32 %v288, %v291
    %vm293 = vweird.f32 %v287
    %vm294 = vweird.f32 %v288
    %vm295 = vmor %vm293, %vm294
    %v296 = vsel %vm295, %v288, %v292
    %v297 = vand.u32 2147483647, %v287
    %vm298 = vcmp.eq.f32.partialorder %v297, 8.507059e+37
    %v299 = vand.u32 %v287, 2147483648
    %v300 = vor.u32 1.1754944e-38, %v299
    %v301 = vsel %vm298, %v300, %v296
    %v302 = vmul.f32 1.0, %v301
    %v303 = vtanh.pop %v209
    %v304 = vmul.f32 %v283, %v245
    %v305 = vmul.f32 %v264, %v303
    %v306 = vadd.f32 %v304, %v305
    %v307 = vtanh.pop %v306
    %v308 = vmul.f32 %v302, %v307
    %309 = vst [vmem:[#allocation8] sm:$0xff] %v308
    %310 = vst [vmem:[#allocation8 + $0x8] sm:$0xff] %v306
    // Predicated region
    $region34: #{tpu_custom_call.1} parent=1 // pred_check
      _
    $region35: #{tpu_custom_call.1} parent=1 // pred_check_branch
      %312 = sbr.rel (0) target = $region37
    $region36: #{tpu_custom_call.1} parent=1 // pred_region
      %314 = vsyncadd [#allocation4], 0
      %s316 = sshll.u32 [#allocation8], 4
      %s317 = int_to_ptr.vmem [resolvable:$true] %s316
      %s318 = sshll.u32 %s5, 4
      %s319 = int_to_ptr.hbm [resolvable:$true] %s318
      %321 = dma.vmem_to_hbm [thread:$0]  %s317, 256, %s319, [#allocation4]
    $region37: #{tpu_custom_call.1} parent=1 // pred_fallthru
      _
    // Predicated region
    $region38: #{tpu_custom_call.1} parent=1 // pred_check
      _
    $region39: #{tpu_custom_call.1} parent=1 // pred_check_branch
      %323 = sbr.rel (0) target = $region41
    $region40: #{tpu_custom_call.1} parent=1 // pred_region
      %325 = dma.done [#allocation4], 256
    $region41: #{tpu_custom_call.1} parent=1 // pred_fallthru
      _
    %326 = vsyncpa [#allocation3], 1
    %327 = vsyncpa [#allocation6], 1
    %328 = vsyncpa [#allocation4], 1

</llo_original>
